<compile_context>
chip_gen: v7x
topology: tpu7x:2x2x1
jax: 0.10.0
libtpu: 0.0.40
codegen_flags: <defaults>
</compile_context>

<pallas_src>
import functools

import jax
import jax.numpy as jnp
from jax.experimental import pallas as pl
from jax.experimental.pallas import tpu as pltpu


_ALIGN = 512          # batch-tile alignment (multiple of the 8-row sublane granule)
_SMALL_BATCH = 32768  # below this the pallas_call launch overhead dominates -> plain XLA


def _round_up(n, m):
    return ((n + m - 1) // m) * m


def _affine_kernel(w_ref, b_ref, x_ref, o_ref):
    """One fused affine tile: o = x @ W_eff + b_eff.

    w_ref: (5, 2)   VMEM   folded weight  (w2 @ w1).T
    b_ref: (1, 2)   VMEM   folded bias    (w2 @ b1 + b2)
    x_ref: (TB, 5)  VMEM   natural-layout input tile
    o_ref: (TB, 2)  VMEM   natural-layout output tile (single dense store)
    """
    o_ref[...] = (
        jnp.dot(x_ref[...], w_ref[...], preferred_element_type=jnp.float32)
        + b_ref[...]
    ).astype(o_ref.dtype)


@functools.partial(jax.jit, static_argnames=("tb", "force_pallas"))
def mymodel_forward(x, w1, b1, w2, b2, *, tb=8192, force_pallas=False):
    """MyModel.forward: fc2(fc1(x)) with PyTorch-layout parameters.

    x : (B, 5) f32
    w1: (10, 5), b1: (10,)   -- fc1 (out_features, in_features)
    w2: (2, 10), b2: (2,)    -- fc2
    returns (B, 2)
    """
    B = x.shape[0]
    out_dtype = x.dtype

    # Fold the two affine layers (no nonlinearity between them):
    #   y = x @ (w2 @ w1).T + (w2 @ b1 + b2)
    w_eff = (w2 @ w1).T.astype(jnp.float32)                    # (5, 2)
    b_eff = (w2 @ b1 + b2).reshape(1, 2).astype(jnp.float32)   # (1, 2)

    if B == 0:
        return jnp.zeros((0, 2), out_dtype)

    if (B < _SMALL_BATCH) and (not force_pallas):
        # Small batch: XLA is already memory-bound-optimal; skip kernel launch overhead.
        return (x.astype(jnp.float32) @ w_eff + b_eff).astype(out_dtype)

    # ---- batch tiling (natural layout, no transpose and no pad on the large-B path) ----
    bp_align = _round_up(B, _ALIGN)
    tb_eff = min(tb, bp_align)
    if bp_align >= 2 * _ALIGN:
        # v7x: keep >= 2 grid steps so ("parallel",) can shard across both TensorCores.
        tb_eff = min(tb_eff, _round_up(pl.cdiv(bp_align, 2), _ALIGN))

    if B >= tb_eff:
        # Zero-copy path: partial last block is handled by Pallas (masked read/write).
        x_in = x.astype(jnp.float32)
        b_rows = B
    else:
        # Tiny-batch (forced) path: single cheap row-pad so the block never exceeds
        # the array extent.
        x_in = jnp.pad(x.astype(jnp.float32), ((0, tb_eff - B), (0, 0)))
        b_rows = tb_eff

    grid = (pl.cdiv(b_rows, tb_eff),)

    out = pl.pallas_call(
        _affine_kernel,
        out_shape=jax.ShapeDtypeStruct((b_rows, 2), jnp.float32),
        grid=grid,
        in_specs=[
            pl.BlockSpec((5, 2), lambda i: (0, 0)),        # folded weight, resident
            pl.BlockSpec((1, 2), lambda i: (0, 0)),        # folded bias, resident
            pl.BlockSpec((tb_eff, 5), lambda i: (i, 0)),   # batch tile of x
        ],
        out_specs=pl.BlockSpec((tb_eff, 2), lambda i: (i, 0)),
        compiler_params=pltpu.CompilerParams(
            dimension_semantics=("parallel",),             # shard batch grid on v7x
            vmem_limit_bytes=40 * 1024 * 1024,             # lane-padded tiles need headroom
        ),
        cost_estimate=pl.CostEstimate(
            flops=2 * B * 5 * 2,
            transcendentals=0,
            bytes_accessed=(5 + 2) * B * 4,
        ),
    )(w_eff, b_eff, x_in)

    if b_rows != B:
        out = out[:B]
    return out.astype(out_dtype)


def init_params(key):
    """Deterministic init mimicking nn.Linear's uniform(-1/sqrt(fan_in), +) ranges."""
    k1, k2, k3, k4 = jax.random.split(key, 4)
    bound1 = 1.0 / jnp.sqrt(5.0)
    bound2 = 1.0 / jnp.sqrt(10.0)
    # PyTorch nn.Linear layout: weight is (out_features, in_features).
    w1 = jax.random.uniform(k1, (10, 5), jnp.float32, -bound1, bound1)
    b1 = jax.random.uniform(k2, (10,), jnp.float32, -bound1, bound1)
    w2 = jax.random.uniform(k3, (2, 10), jnp.float32, -bound2, bound2)
    b2 = jax.random.uniform(k4, (2,), jnp.float32, -bound2, bound2)
    return w1, b1, w2, b2


if __name__ == "__main__":
    key = jax.random.PRNGKey(0)
    kx, kp, kx2 = jax.random.split(key, 3)

    w1, b1, w2, b2 = init_params(kp)

    # Small-shape test; force the Pallas path so the kernel is exercised.
    B = 8
    x = jax.random.normal(kx, (B, 5), jnp.float32)
    out = jax.block_until_ready(mymodel_forward(x, w1, b1, w2, b2, force_pallas=True))
    ref = (x @ w1.T + b1) @ w2.T + b2
    assert out.shape == (B, 2)
    assert jnp.allclose(out, ref, atol=1e-5, rtol=1e-5)

    # Multi-step grid with a partial last block (exercises the masked edge path).
    B2 = 1300
    x2 = jax.random.normal(kx2, (B2, 5), jnp.float32)
    out2 = jax.block_until_ready(
        mymodel_forward(x2, w1, b1, w2, b2, tb=512, force_pallas=True))
    ref2 = (x2 @ w1.T + b1) @ w2.T + b2
    assert out2.shape == (B2, 2)
    assert jnp.allclose(out2, ref2, atol=1e-5, rtol=1e-5)

    print("KERNEL_OK")
</pallas_src>

<mosaic_0001>
module attributes {stable_mosaic.version = 11 : i64} {
  func.func @_affine_kernel(%arg0: i32, %arg1: memref<5x2xf32, #tpu.memory_space<vmem>>, %arg2: memref<1x2xf32, #tpu.memory_space<vmem>>, %arg3: memref<512x5xf32, #tpu.memory_space<vmem>>, %arg4: memref<512x2xf32, #tpu.memory_space<vmem>>) attributes {dimension_semantics = [#tpu.dimension_semantics<parallel>], iteration_bounds = array<i64: 1>, scalar_prefetch = 0 : i64, scratch_operands = 0 : i64, tpu.core_type = #tpu.core_type<tc>, window_params = [{pipeline_mode = #tpu.pipeline_mode<synchronous>, transform_indices = @transform_0, window_bounds = array<i64: 5, 2>}, {pipeline_mode = #tpu.pipeline_mode<synchronous>, transform_indices = @transform_1, window_bounds = array<i64: 1, 2>}, {transform_indices = @transform_2, window_bounds = array<i64: 512, 5>}, {transform_indices = @transform_3, window_bounds = array<i64: 512, 2>}]} {
    %c0 = arith.constant 0 : index
    %c0_0 = arith.constant 0 : index
    %0 = vector.load %arg3[%c0, %c0_0] : memref<512x5xf32, #tpu.memory_space<vmem>>, vector<512x5xf32>
    %c0_1 = arith.constant 0 : index
    %c0_2 = arith.constant 0 : index
    %1 = vector.load %arg1[%c0_1, %c0_2] : memref<5x2xf32, #tpu.memory_space<vmem>>, vector<5x2xf32>
    %cst = arith.constant dense<0.000000e+00> : vector<512x2xf32>
    %2 = tpu.matmul %0, %1, %cst {dimension_numbers = #tpu.dot_dimension_numbers<[1], [0], [0], [1], [0, 0, 1, 1], [], []>} : vector<512x5xf32>, vector<5x2xf32>, vector<512x2xf32> -> vector<512x2xf32>
    %c0_3 = arith.constant 0 : index
    %c0_4 = arith.constant 0 : index
    %3 = vector.load %arg2[%c0_3, %c0_4] : memref<1x2xf32, #tpu.memory_space<vmem>>, vector<1x2xf32>
    %4 = vector.broadcast %3 : vector<1x2xf32> to vector<512x2xf32>
    %5 = arith.addf %2, %4 : vector<512x2xf32>
    %c0_5 = arith.constant 0 : index
    %c0_6 = arith.constant 0 : index
    %6 = vector.load %arg4[%c0_5, %c0_6] : memref<512x2xf32, #tpu.memory_space<vmem>>, vector<512x2xf32>
    tpu.vector_store %arg4[%c0_5, %c0_6], %5 {strides = array<i32>} : memref<512x2xf32, #tpu.memory_space<vmem>>, vector<512x2xf32>,
    return
  }
  func.func @transform_0(%arg0: i32) -> (i32, i32) {
    %c0_i32 = arith.constant 0 : i32
    %c0_i32_0 = arith.constant 0 : i32
    %c0_i32_1 = arith.constant 0 : i32
    return %c0_i32, %c0_i32_0 : i32, i32
  }
  func.func @transform_1(%arg0: i32) -> (i32, i32) {
    %c0_i32 = arith.constant 0 : i32
    %c0_i32_0 = arith.constant 0 : i32
    %c0_i32_1 = arith.constant 0 : i32
    return %c0_i32, %c0_i32_0 : i32, i32
  }
  func.func @transform_2(%arg0: i32) -> (i32, i32) {
    %c0_i32 = arith.constant 0 : i32
    %c0_i32_0 = arith.constant 0 : i32
    return %arg0, %c0_i32 : i32, i32
  }
  func.func @transform_3(%arg0: i32) -> (i32, i32) {
    %c0_i32 = arith.constant 0 : i32
    %c0_i32_0 = arith.constant 0 : i32
    return %arg0, %c0_i32 : i32, i32
  }
}

</mosaic_0001>

<llo_original>
// kernel: mymodel_forward.1
$region0: #{mymodel_forward.1}
  #allocation0 [shape = 'u32[]', space=smem, size = 0x4, offset = 0x4, fixed_abs, tag = 'smem constant byte address 0x4 - core index']
  #allocation1 [shape = 'u32[144,128]{1,0:T(1,128)}', space=vmem, size = 0x12000, scoped, tag = 'internal scratch']
  %s0 = inlined_call_operand.vmem [shape: f32[5,2], index: 0, kind: input, shape index: {}]
  %s1 = inlined_call_operand.vmem [shape: f32[1,2], index: 1, kind: input, shape index: {}]
  %s2 = inlined_call_operand.vmem [shape: f32[512,5], index: 2, kind: input, shape index: {}]
  %s3 = inlined_call_operand.vmem [shape: f32[512,2], index: 3, kind: output, shape index: {}]
  %s4 = sld [smem:[#allocation0]]
  $region22: #{mymodel_forward.1} parent=0
    _
  %s6 = ssub.s32 1, %s4
  %s7 = scalar_select 0, %s6, %s4
  // Predicated region
  $region2: #{mymodel_forward.1} parent=0 // pred_check
    _
  $region3: #{mymodel_forward.1} parent=0 // pred_check_branch
    %9 = sbr.rel (0) target = $region5
  $region4: #{mymodel_forward.1} parent=0 // pred_region
    _
  $region5: #{mymodel_forward.1} parent=0 // pred_fallthru
    _
  // Predicated region
  $region6: #{mymodel_forward.1} parent=0 // pred_check
    _
  $region7: #{mymodel_forward.1} parent=0 // pred_check_branch
    %11 = sbr.rel (0) target = $region9
  $region8: #{mymodel_forward.1} parent=0 // pred_region
    _
  $region9: #{mymodel_forward.1} parent=0 // pred_fallthru
    _
  // Predicated region
  $region10: #{mymodel_forward.1} parent=0 // pred_check
    _
  $region11: #{mymodel_forward.1} parent=0 // pred_check_branch
    %13 = sbr.rel (0) target = $region13
  $region12: #{mymodel_forward.1} parent=0 // pred_region
    _
  $region13: #{mymodel_forward.1} parent=0 // pred_fallthru
    _
  %v14 = vld [vmem:[%s2] sm:$0xff]
  %v15 = vld [vmem:[%s2 + $0x8] sm:$0xff]
  %v16 = vld [vmem:[%s2 + $0x10] sm:$0xff]
  %v17 = vld [vmem:[%s2 + $0x18] sm:$0xff]
  %v18 = vld [vmem:[%s2 + $0x20] sm:$0xff]
  %v19 = vld [vmem:[%s2 + $0x28] sm:$0xff]
  %v20 = vld [vmem:[%s2 + $0x30] sm:$0xff]
  %v21 = vld [vmem:[%s2 + $0x38] sm:$0xff]
  %v22 = vld [vmem:[%s2 + $0x40] sm:$0xff]
  %v23 = vld [vmem:[%s2 + $0x48] sm:$0xff]
  %v24 = vld [vmem:[%s2 + $0x50] sm:$0xff]
  %v25 = vld [vmem:[%s2 + $0x58] sm:$0xff]
  %v26 = vld [vmem:[%s2 + $0x60] sm:$0xff]
  %v27 = vld [vmem:[%s2 + $0x68] sm:$0xff]
  %v28 = vld [vmem:[%s2 + $0x70] sm:$0xff]
  %v29 = vld [vmem:[%s2 + $0x78] sm:$0xff]
  %v30 = vld [vmem:[%s2 + $0x80] sm:$0xff]
  %v31 = vld [vmem:[%s2 + $0x88] sm:$0xff]
  %v32 = vld [vmem:[%s2 + $0x90] sm:$0xff]
  %v33 = vld [vmem:[%s2 + $0x98] sm:$0xff]
  %v34 = vld [vmem:[%s2 + $0xa0] sm:$0xff]
  %v35 = vld [vmem:[%s2 + $0xa8] sm:$0xff]
  %v36 = vld [vmem:[%s2 + $0xb0] sm:$0xff]
  %v37 = vld [vmem:[%s2 + $0xb8] sm:$0xff]
  %v38 = vld [vmem:[%s2 + $0xc0] sm:$0xff]
  %v39 = vld [vmem:[%s2 + $0xc8] sm:$0xff]
  %v40 = vld [vmem:[%s2 + $0xd0] sm:$0xff]
  %v41 = vld [vmem:[%s2 + $0xd8] sm:$0xff]
  %v42 = vld [vmem:[%s2 + $0xe0] sm:$0xff]
  %v43 = vld [vmem:[%s2 + $0xe8] sm:$0xff]
  %v44 = vld [vmem:[%s2 + $0xf0] sm:$0xff]
  %v45 = vld [vmem:[%s2 + $0xf8] sm:$0xff]
  %v46 = vld [vmem:[%s2 + $0x100] sm:$0xff]
  %v47 = vld [vmem:[%s2 + $0x108] sm:$0xff]
  %v48 = vld [vmem:[%s2 + $0x110] sm:$0xff]
  %v49 = vld [vmem:[%s2 + $0x118] sm:$0xff]
  %v50 = vld [vmem:[%s2 + $0x120] sm:$0xff]
  %v51 = vld [vmem:[%s2 + $0x128] sm:$0xff]
  %v52 = vld [vmem:[%s2 + $0x130] sm:$0xff]
  %v53 = vld [vmem:[%s2 + $0x138] sm:$0xff]
  %v54 = vld [vmem:[%s2 + $0x140] sm:$0xff]
  %v55 = vld [vmem:[%s2 + $0x148] sm:$0xff]
  %v56 = vld [vmem:[%s2 + $0x150] sm:$0xff]
  %v57 = vld [vmem:[%s2 + $0x158] sm:$0xff]
  %v58 = vld [vmem:[%s2 + $0x160] sm:$0xff]
  %v59 = vld [vmem:[%s2 + $0x168] sm:$0xff]
  %v60 = vld [vmem:[%s2 + $0x170] sm:$0xff]
  %v61 = vld [vmem:[%s2 + $0x178] sm:$0xff]
  %v62 = vld [vmem:[%s2 + $0x180] sm:$0xff]
  %v63 = vld [vmem:[%s2 + $0x188] sm:$0xff]
  %v64 = vld [vmem:[%s2 + $0x190] sm:$0xff]
  %v65 = vld [vmem:[%s2 + $0x198] sm:$0xff]
  %v66 = vld [vmem:[%s2 + $0x1a0] sm:$0xff]
  %v67 = vld [vmem:[%s2 + $0x1a8] sm:$0xff]
  %v68 = vld [vmem:[%s2 + $0x1b0] sm:$0xff]
  %v69 = vld [vmem:[%s2 + $0x1b8] sm:$0xff]
  %v70 = vld [vmem:[%s2 + $0x1c0] sm:$0xff]
  %v71 = vld [vmem:[%s2 + $0x1c8] sm:$0xff]
  %v72 = vld [vmem:[%s2 + $0x1d0] sm:$0xff]
  %v73 = vld [vmem:[%s2 + $0x1d8] sm:$0xff]
  %v74 = vld [vmem:[%s2 + $0x1e0] sm:$0xff]
  %v75 = vld [vmem:[%s2 + $0x1e8] sm:$0xff]
  %v76 = vld [vmem:[%s2 + $0x1f0] sm:$0xff]
  %v77 = vld [vmem:[%s2 + $0x1f8] sm:$0xff]
  %v78 = vld [vmem:[%s0] sm:$0x1f]
  %v79 = vld [vmem:[%s1] sm:$0x1]
  %v81 = vlaneseq
  %v82 = vshrl.u32 %v81, 7
  %v83 = vsub.s32 0, %v82
  %v84 = vrot.slane %v79, %v83
  %vm86 = vcmask 39936
  %v88 = vsel %vm86, %v14, 0
  %v91 = vsel %vm86, %v15, 0
  %v94 = vsel %vm86, %v16, 0
  %v97 = vsel %vm86, %v17, 0
  %v100 = vsel %vm86, %v18, 0
  %v103 = vsel %vm86, %v19, 0
  %v106 = vsel %vm86, %v20, 0
  %v109 = vsel %vm86, %v21, 0
  %v112 = vsel %vm86, %v22, 0
  %v115 = vsel %vm86, %v23, 0
  %v118 = vsel %vm86, %v24, 0
  %v121 = vsel %vm86, %v25, 0
  %v124 = vsel %vm86, %v26, 0
  %v127 = vsel %vm86, %v27, 0
  %v130 = vsel %vm86, %v28, 0
  %v133 = vsel %vm86, %v29, 0
  %v136 = vsel %vm86, %v30, 0
  %v139 = vsel %vm86, %v31, 0
  %v142 = vsel %vm86, %v32, 0
  %v145 = vsel %vm86, %v33, 0
  %v148 = vsel %vm86, %v34, 0
  %v151 = vsel %vm86, %v35, 0
  %v154 = vsel %vm86, %v36, 0
  %v157 = vsel %vm86, %v37, 0
  %v160 = vsel %vm86, %v38, 0
  %v163 = vsel %vm86, %v39, 0
  %v166 = vsel %vm86, %v40, 0
  %v169 = vsel %vm86, %v41, 0
  %v172 = vsel %vm86, %v42, 0
  %v175 = vsel %vm86, %v43, 0
  %v178 = vsel %vm86, %v44, 0
  %v181 = vsel %vm86, %v45, 0
  %v184 = vsel %vm86, %v46, 0
  %v187 = vsel %vm86, %v47, 0
  %v190 = vsel %vm86, %v48, 0
  %v193 = vsel %vm86, %v49, 0
  %v196 = vsel %vm86, %v50, 0
  %v199 = vsel %vm86, %v51, 0
  %v202 = vsel %vm86, %v52, 0
  %v205 = vsel %vm86, %v53, 0
  %v208 = vsel %vm86, %v54, 0
  %v211 = vsel %vm86, %v55, 0
  %v214 = vsel %vm86, %v56, 0
  %v217 = vsel %vm86, %v57, 0
  %v220 = vsel %vm86, %v58, 0
  %v223 = vsel %vm86, %v59, 0
  %v226 = vsel %vm86, %v60, 0
  %v229 = vsel %vm86, %v61, 0
  %v232 = vsel %vm86, %v62, 0
  %v235 = vsel %vm86, %v63, 0
  %v238 = vsel %vm86, %v64, 0
  %v241 = vsel %vm86, %v65, 0
  %v244 = vsel %vm86, %v66, 0
  %v247 = vsel %vm86, %v67, 0
  %v250 = vsel %vm86, %v68, 0
  %v253 = vsel %vm86, %v69, 0
  %v256 = vsel %vm86, %v70, 0
  %v259 = vsel %vm86, %v71, 0
  %v262 = vsel %vm86, %v72, 0
  %v265 = vsel %vm86, %v73, 0
  %v268 = vsel %vm86, %v74, 0
  %v271 = vsel %vm86, %v75, 0
  %v274 = vsel %vm86, %v76, 0
  %v277 = vsel %vm86, %v77, 0
  %vm279 = vcmask 1044480
  %v281 = vsel %vm279, %v78, 0
  %283 = vmatprep.subr.mxu0 0.0
  %284 = vmatpush1.msra.mxu0 %v281
  %285 = vmatprep.subr.mxu0 0.0
  %286 = vmatpush1.msra.mxu0 0.0
  %287 = vmatprep.subr.mxu0 0.0
  %288 = vmatpush1.msra.mxu0 0.0
  %289 = vmatprep.subr.mxu0 0.0
  %290 = vmatpush1.msra.mxu0 0.0
  %291 = vmatprep.subr.mxu0 0.0
  %292 = vmatpush1.msra.mxu0 0.0
  %293 = vmatprep.subr.mxu0 0.0
  %294 = vmatpush1.msra.mxu0 0.0
  %295 = vmatprep.subr.mxu0 0.0
  %296 = vmatpush1.msra.mxu0 0.0
  %297 = vmatprep.subr.mxu0 0.0
  %298 = vmatpush1.msra.mxu0 0.0
  %299 = vmatprep.subr.mxu0 0.0
  %300 = vmatpush1.msra.mxu0 0.0
  %301 = vmatprep.subr.mxu0 0.0
  %302 = vmatpush1.msra.mxu0 0.0
  %303 = vmatprep.subr.mxu0 0.0
  %304 = vmatpush1.msra.mxu0 0.0
  %305 = vmatprep.subr.mxu0 0.0
  %306 = vmatpush1.msra.mxu0 0.0
  %307 = vmatprep.subr.mxu0 0.0
  %308 = vmatpush1.msra.mxu0 0.0
  %309 = vmatprep.subr.mxu0 0.0
  %310 = vmatpush1.msra.mxu0 0.0
  %311 = vmatprep.subr.mxu0 0.0
  %312 = vmatpush1.msra.mxu0 0.0
  %313 = vmatprep.subr.mxu0 0.0
  %314 = vmatpush1.msra.mxu0 0.0
  %315 = vmatprep.subr.mxu0 0.0
  %316 = vmatpush1.msra.mxu0 0.0
  %317 = vmatprep.subr.mxu0 0.0
  %318 = vmatpush1.msra.mxu0 0.0
  %319 = vmatprep.subr.mxu0 0.0
  %320 = vmatpush1.msra.mxu0 0.0
  %321 = vmatprep.subr.mxu0 0.0
  %322 = vmatpush1.msra.mxu0 0.0
  %323 = vmatprep.subr.mxu0 0.0
  %324 = vmatpush1.msra.mxu0 0.0
  %325 = vmatprep.subr.mxu0 0.0
  %326 = vmatpush1.msra.mxu0 0.0
  %327 = vmatprep.subr.mxu0 0.0
  %328 = vmatpush1.msra.mxu0 0.0
  %329 = vmatprep.subr.mxu0 0.0
  %330 = vmatpush1.msra.mxu0 0.0
  %331 = vmatprep.subr.mxu0 0.0
  %332 = vmatpush1.msra.mxu0 0.0
  %333 = vmatprep.subr.mxu0 0.0
  %334 = vmatpush1.msra.mxu0 0.0
  %335 = vmatprep.subr.mxu0 0.0
  %336 = vmatpush1.msra.mxu0 0.0
  %337 = vmatprep.subr.mxu0 0.0
  %338 = vmatpush1.msra.mxu0 0.0
  %339 = vmatprep.subr.mxu0 0.0
  %340 = vmatpush1.msra.mxu0 0.0
  %341 = vmatprep.subr.mxu0 0.0
  %342 = vmatpush1.msra.mxu0 0.0
  %343 = vmatprep.subr.mxu0 0.0
  %344 = vmatpush1.msra.mxu0 0.0
  %345 = vmatprep.subr.mxu0 0.0
  %346 = vmatpush1.msra.mxu0 0.0
  %347 = vmatprep.mubr.f32.mxu0 0.0
  %348 = vmatmul.mubr.f32.gmra.mrb[0].mxu0 %v88
  %v349 = vpop.f32.mrb[0].mxu0
  %v350 = vadd.f32 %v84, %v349
  %v351 = vpop.f32.mrb[0].mxu0
  %352 = vmatprep.mubr.f32.mxu0 0.0
  %353 = vmatmul.mubr.f32.gmra.mrb[0].mxu0 %v91
  %v354 = vpop.f32.mrb[0].mxu0
  %v355 = vadd.f32 %v84, %v354
  %v356 = vpop.f32.mrb[0].mxu0
  %357 = vmatprep.mubr.f32.mxu0 0.0
  %358 = vmatmul.mubr.f32.gmra.mrb[0].mxu0 %v94
  %v359 = vpop.f32.mrb[0].mxu0
  %v360 = vadd.f32 %v84, %v359
  %v361 = vpop.f32.mrb[0].mxu0
  %362 = vmatprep.mubr.f32.mxu0 0.0
  %363 = vmatmul.mubr.f32.gmra.mrb[0].mxu0 %v97
  %v364 = vpop.f32.mrb[0].mxu0
  %v365 = vadd.f32 %v84, %v364
  %v366 = vpop.f32.mrb[0].mxu0
  %367 = vmatprep.mubr.f32.mxu0 0.0
  %368 = vmatmul.mubr.f32.gmra.mrb[0].mxu0 %v100
  %v369 = vpop.f32.mrb[0].mxu0
  %v370 = vadd.f32 %v84, %v369
  %v371 = vpop.f32.mrb[0].mxu0
  %372 = vmatprep.mubr.f32.mxu0 0.0
  %373 = vmatmul.mubr.f32.gmra.mrb[0].mxu0 %v103
  %v374 = vpop.f32.mrb[0].mxu0
  %v375 = vadd.f32 %v84, %v374
  %v376 = vpop.f32.mrb[0].mxu0
  %377 = vmatprep.mubr.f32.mxu0 0.0
  %378 = vmatmul.mubr.f32.gmra.mrb[0].mxu0 %v106
  %v379 = vpop.f32.mrb[0].mxu0
  %v380 = vadd.f32 %v84, %v379
  %v381 = vpop.f32.mrb[0].mxu0
  %382 = vmatprep.mubr.f32.mxu0 0.0
  %383 = vmatmul.mubr.f32.gmra.mrb[0].mxu0 %v109
  %v384 = vpop.f32.mrb[0].mxu0
  %v385 = vadd.f32 %v84, %v384
  %v386 = vpop.f32.mrb[0].mxu0
  %387 = vmatprep.mubr.f32.mxu0 0.0
  %388 = vmatmul.mubr.f32.gmra.mrb[0].mxu0 %v112
  %v389 = vpop.f32.mrb[0].mxu0
  %v390 = vadd.f32 %v84, %v389
  %v391 = vpop.f32.mrb[0].mxu0
  %392 = vmatprep.mubr.f32.mxu0 0.0
  %393 = vmatmul.mubr.f32.gmra.mrb[0].mxu0 %v115
  %v394 = vpop.f32.mrb[0].mxu0
  %v395 = vadd.f32 %v84, %v394
  %v396 = vpop.f32.mrb[0].mxu0
  %397 = vmatprep.mubr.f32.mxu0 0.0
  %398 = vmatmul.mubr.f32.gmra.mrb[0].mxu0 %v118
  %v399 = vpop.f32.mrb[0].mxu0
  %v400 = vadd.f32 %v84, %v399
  %v401 = vpop.f32.mrb[0].mxu0
  %402 = vmatprep.mubr.f32.mxu0 0.0
  %403 = vmatmul.mubr.f32.gmra.mrb[0].mxu0 %v121
  %v404 = vpop.f32.mrb[0].mxu0
  %v405 = vadd.f32 %v84, %v404
  %v406 = vpop.f32.mrb[0].mxu0
  %407 = vmatprep.mubr.f32.mxu0 0.0
  %408 = vmatmul.mubr.f32.gmra.mrb[0].mxu0 %v124
  %v409 = vpop.f32.mrb[0].mxu0
  %v410 = vadd.f32 %v84, %v409
  %v411 = vpop.f32.mrb[0].mxu0
  %412 = vmatprep.mubr.f32.mxu0 0.0
  %413 = vmatmul.mubr.f32.gmra.mrb[0].mxu0 %v127
  %v414 = vpop.f32.mrb[0].mxu0
  %v415 = vadd.f32 %v84, %v414
  %v416 = vpop.f32.mrb[0].mxu0
  %417 = vmatprep.mubr.f32.mxu0 0.0
  %418 = vmatmul.mubr.f32.gmra.mrb[0].mxu0 %v130
  %v419 = vpop.f32.mrb[0].mxu0
  %v420 = vadd.f32 %v84, %v419
  %v421 = vpop.f32.mrb[0].mxu0
  %422 = vmatprep.mubr.f32.mxu0 0.0
  %423 = vmatmul.mubr.f32.gmra.mrb[0].mxu0 %v133
  %v424 = vpop.f32.mrb[0].mxu0
  %v425 = vadd.f32 %v84, %v424
  %v426 = vpop.f32.mrb[0].mxu0
  %427 = vmatprep.mubr.f32.mxu0 0.0
  %428 = vmatmul.mubr.f32.gmra.mrb[0].mxu0 %v136
  %v429 = vpop.f32.mrb[0].mxu0
  %v430 = vadd.f32 %v84, %v429
  %v431 = vpop.f32.mrb[0].mxu0
  %432 = vmatprep.mubr.f32.mxu0 0.0
  %433 = vmatmul.mubr.f32.gmra.mrb[0].mxu0 %v139
  %v434 = vpop.f32.mrb[0].mxu0
  %v435 = vadd.f32 %v84, %v434
  %v436 = vpop.f32.mrb[0].mxu0
  %437 = vmatprep.mubr.f32.mxu0 0.0
  %438 = vmatmul.mubr.f32.gmra.mrb[0].mxu0 %v142
  %v439 = vpop.f32.mrb[0].mxu0
  %v440 = vadd.f32 %v84, %v439
  %v441 = vpop.f32.mrb[0].mxu0
  %442 = vmatprep.mubr.f32.mxu0 0.0
  %443 = vmatmul.mubr.f32.gmra.mrb[0].mxu0 %v145
  %v444 = vpop.f32.mrb[0].mxu0
  %v445 = vadd.f32 %v84, %v444
  %v446 = vpop.f32.mrb[0].mxu0
  %447 = vmatprep.mubr.f32.mxu0 0.0
  %448 = vmatmul.mubr.f32.gmra.mrb[0].mxu0 %v148
  %v449 = vpop.f32.mrb[0].mxu0
  %v450 = vadd.f32 %v84, %v449
  %v451 = vpop.f32.mrb[0].mxu0
  %452 = vmatprep.mubr.f32.mxu0 0.0
  %453 = vmatmul.mubr.f32.gmra.mrb[0].mxu0 %v151
  %v454 = vpop.f32.mrb[0].mxu0
  %v455 = vadd.f32 %v84, %v454
  %v456 = vpop.f32.mrb[0].mxu0
  %457 = vmatprep.mubr.f32.mxu0 0.0
  %458 = vmatmul.mubr.f32.gmra.mrb[0].mxu0 %v154
  %v459 = vpop.f32.mrb[0].mxu0
  %v460 = vadd.f32 %v84, %v459
  %v461 = vpop.f32.mrb[0].mxu0
  %462 = vmatprep.mubr.f32.mxu0 0.0
  %463 = vmatmul.mubr.f32.gmra.mrb[0].mxu0 %v157
  %v464 = vpop.f32.mrb[0].mxu0
  %v465 = vadd.f32 %v84, %v464
  %v466 = vpop.f32.mrb[0].mxu0
  %467 = vmatprep.mubr.f32.mxu0 0.0
  %468 = vmatmul.mubr.f32.gmra.mrb[0].mxu0 %v160
  %v469 = vpop.f32.mrb[0].mxu0
  %v470 = vadd.f32 %v84, %v469
  %v471 = vpop.f32.mrb[0].mxu0
  %472 = vmatprep.mubr.f32.mxu0 0.0
  %473 = vmatmul.mubr.f32.gmra.mrb[0].mxu0 %v163
  %v474 = vpop.f32.mrb[0].mxu0
  %v475 = vadd.f32 %v84, %v474
  %v476 = vpop.f32.mrb[0].mxu0
  %477 = vmatprep.mubr.f32.mxu0 0.0
  %478 = vmatmul.mubr.f32.gmra.mrb[0].mxu0 %v166
  %v479 = vpop.f32.mrb[0].mxu0
  %v480 = vadd.f32 %v84, %v479
  %v481 = vpop.f32.mrb[0].mxu0
  %482 = vmatprep.mubr.f32.mxu0 0.0
  %483 = vmatmul.mubr.f32.gmra.mrb[0].mxu0 %v169
  %v484 = vpop.f32.mrb[0].mxu0
  %v485 = vadd.f32 %v84, %v484
  %v486 = vpop.f32.mrb[0].mxu0
  %487 = vmatprep.mubr.f32.mxu0 0.0
  %488 = vmatmul.mubr.f32.gmra.mrb[0].mxu0 %v172
  %v489 = vpop.f32.mrb[0].mxu0
  %v490 = vadd.f32 %v84, %v489
  %v491 = vpop.f32.mrb[0].mxu0
  %492 = vmatprep.mubr.f32.mxu0 0.0
  %493 = vmatmul.mubr.f32.gmra.mrb[0].mxu0 %v175
  %v494 = vpop.f32.mrb[0].mxu0
  %v495 = vadd.f32 %v84, %v494
  %v496 = vpop.f32.mrb[0].mxu0
  %497 = vmatprep.mubr.f32.mxu0 0.0
  %498 = vmatmul.mubr.f32.gmra.mrb[0].mxu0 %v178
  %v499 = vpop.f32.mrb[0].mxu0
  %v500 = vadd.f32 %v84, %v499
  %v501 = vpop.f32.mrb[0].mxu0
  %502 = vmatprep.mubr.f32.mxu0 0.0
  %503 = vmatmul.mubr.f32.gmra.mrb[0].mxu0 %v181
  %v504 = vpop.f32.mrb[0].mxu0
  %v505 = vadd.f32 %v84, %v504
  %v506 = vpop.f32.mrb[0].mxu0
  %507 = vmatprep.mubr.f32.mxu0 0.0
  %508 = vmatmul.mubr.f32.gmra.mrb[0].mxu0 %v184
  %v509 = vpop.f32.mrb[0].mxu0
  %v510 = vadd.f32 %v84, %v509
  %v511 = vpop.f32.mrb[0].mxu0
  %512 = vmatprep.mubr.f32.mxu0 0.0
  %513 = vmatmul.mubr.f32.gmra.mrb[0].mxu0 %v187
  %v514 = vpop.f32.mrb[0].mxu0
  %v515 = vadd.f32 %v84, %v514
  %v516 = vpop.f32.mrb[0].mxu0
  %517 = vmatprep.mubr.f32.mxu0 0.0
  %518 = vmatmul.mubr.f32.gmra.mrb[0].mxu0 %v190
  %v519 = vpop.f32.mrb[0].mxu0
  %v520 = vadd.f32 %v84, %v519
  %v521 = vpop.f32.mrb[0].mxu0
  %522 = vmatprep.mubr.f32.mxu0 0.0
  %523 = vmatmul.mubr.f32.gmra.mrb[0].mxu0 %v193
  %v524 = vpop.f32.mrb[0].mxu0
  %v525 = vadd.f32 %v84, %v524
  %v526 = vpop.f32.mrb[0].mxu0
  %527 = vmatprep.mubr.f32.mxu0 0.0
  %528 = vmatmul.mubr.f32.gmra.mrb[0].mxu0 %v196
  %v529 = vpop.f32.mrb[0].mxu0
  %v530 = vadd.f32 %v84, %v529
  %v531 = vpop.f32.mrb[0].mxu0
  %532 = vmatprep.mubr.f32.mxu0 0.0
  %533 = vmatmul.mubr.f32.gmra.mrb[0].mxu0 %v199
  %v534 = vpop.f32.mrb[0].mxu0
  %v535 = vadd.f32 %v84, %v534
  %v536 = vpop.f32.mrb[0].mxu0
  %537 = vmatprep.mubr.f32.mxu0 0.0
  %538 = vmatmul.mubr.f32.gmra.mrb[0].mxu0 %v202
  %v539 = vpop.f32.mrb[0].mxu0
  %v540 = vadd.f32 %v84, %v539
  %v541 = vpop.f32.mrb[0].mxu0
  %542 = vmatprep.mubr.f32.mxu0 0.0
  %543 = vmatmul.mubr.f32.gmra.mrb[0].mxu0 %v205
  %v544 = vpop.f32.mrb[0].mxu0
  %v545 = vadd.f32 %v84, %v544
  %v546 = vpop.f32.mrb[0].mxu0
  %547 = vmatprep.mubr.f32.mxu0 0.0
  %548 = vmatmul.mubr.f32.gmra.mrb[0].mxu0 %v208
  %v549 = vpop.f32.mrb[0].mxu0
  %v550 = vadd.f32 %v84, %v549
  %v551 = vpop.f32.mrb[0].mxu0
  %552 = vmatprep.mubr.f32.mxu0 0.0
  %553 = vmatmul.mubr.f32.gmra.mrb[0].mxu0 %v211
  %v554 = vpop.f32.mrb[0].mxu0
  %v555 = vadd.f32 %v84, %v554
  %v556 = vpop.f32.mrb[0].mxu0
  %557 = vmatprep.mubr.f32.mxu0 0.0
  %558 = vmatmul.mubr.f32.gmra.mrb[0].mxu0 %v214
  %v559 = vpop.f32.mrb[0].mxu0
  %v560 = vadd.f32 %v84, %v559
  %v561 = vpop.f32.mrb[0].mxu0
  %562 = vmatprep.mubr.f32.mxu0 0.0
  %563 = vmatmul.mubr.f32.gmra.mrb[0].mxu0 %v217
  %v564 = vpop.f32.mrb[0].mxu0
  %v565 = vadd.f32 %v84, %v564
  %v566 = vpop.f32.mrb[0].mxu0
  %567 = vmatprep.mubr.f32.mxu0 0.0
  %568 = vmatmul.mubr.f32.gmra.mrb[0].mxu0 %v220
  %v569 = vpop.f32.mrb[0].mxu0
  %v570 = vadd.f32 %v84, %v569
  %v571 = vpop.f32.mrb[0].mxu0
  %572 = vmatprep.mubr.f32.mxu0 0.0
  %573 = vmatmul.mubr.f32.gmra.mrb[0].mxu0 %v223
  %v574 = vpop.f32.mrb[0].mxu0
  %v575 = vadd.f32 %v84, %v574
  %v576 = vpop.f32.mrb[0].mxu0
  %577 = vmatprep.mubr.f32.mxu0 0.0
  %578 = vmatmul.mubr.f32.gmra.mrb[0].mxu0 %v226
  %v579 = vpop.f32.mrb[0].mxu0
  %v580 = vadd.f32 %v84, %v579
  %v581 = vpop.f32.mrb[0].mxu0
  %582 = vmatprep.mubr.f32.mxu0 0.0
  %583 = vmatmul.mubr.f32.gmra.mrb[0].mxu0 %v229
  %v584 = vpop.f32.mrb[0].mxu0
  %v585 = vadd.f32 %v84, %v584
  %v586 = vpop.f32.mrb[0].mxu0
  %587 = vmatprep.mubr.f32.mxu0 0.0
  %588 = vmatmul.mubr.f32.gmra.mrb[0].mxu0 %v232
  %v589 = vpop.f32.mrb[0].mxu0
  %v590 = vadd.f32 %v84, %v589
  %v591 = vpop.f32.mrb[0].mxu0
  %592 = vmatprep.mubr.f32.mxu0 0.0
  %593 = vmatmul.mubr.f32.gmra.mrb[0].mxu0 %v235
  %v594 = vpop.f32.mrb[0].mxu0
  %v595 = vadd.f32 %v84, %v594
  %v596 = vpop.f32.mrb[0].mxu0
  %597 = vmatprep.mubr.f32.mxu0 0.0
  %598 = vmatmul.mubr.f32.gmra.mrb[0].mxu0 %v238
  %v599 = vpop.f32.mrb[0].mxu0
  %v600 = vadd.f32 %v84, %v599
  %v601 = vpop.f32.mrb[0].mxu0
  %602 = vmatprep.mubr.f32.mxu0 0.0
  %603 = vmatmul.mubr.f32.gmra.mrb[0].mxu0 %v241
  %v604 = vpop.f32.mrb[0].mxu0
  %v605 = vadd.f32 %v84, %v604
  %v606 = vpop.f32.mrb[0].mxu0
  %607 = vmatprep.mubr.f32.mxu0 0.0
  %608 = vmatmul.mubr.f32.gmra.mrb[0].mxu0 %v244
  %v609 = vpop.f32.mrb[0].mxu0
  %v610 = vadd.f32 %v84, %v609
  %v611 = vpop.f32.mrb[0].mxu0
  %612 = vmatprep.mubr.f32.mxu0 0.0
  %613 = vmatmul.mubr.f32.gmra.mrb[0].mxu0 %v247
  %v614 = vpop.f32.mrb[0].mxu0
  %v615 = vadd.f32 %v84, %v614
  %v616 = vpop.f32.mrb[0].mxu0
  %617 = vmatprep.mubr.f32.mxu0 0.0
  %618 = vmatmul.mubr.f32.gmra.mrb[0].mxu0 %v250
  %v619 = vpop.f32.mrb[0].mxu0
  %v620 = vadd.f32 %v84, %v619
  %v621 = vpop.f32.mrb[0].mxu0
  %622 = vmatprep.mubr.f32.mxu0 0.0
  %623 = vmatmul.mubr.f32.gmra.mrb[0].mxu0 %v253
  %v624 = vpop.f32.mrb[0].mxu0
  %v625 = vadd.f32 %v84, %v624
  %v626 = vpop.f32.mrb[0].mxu0
  %627 = vmatprep.mubr.f32.mxu0 0.0
  %628 = vmatmul.mubr.f32.gmra.mrb[0].mxu0 %v256
  %v629 = vpop.f32.mrb[0].mxu0
  %v630 = vadd.f32 %v84, %v629
  %v631 = vpop.f32.mrb[0].mxu0
  %632 = vmatprep.mubr.f32.mxu0 0.0
  %633 = vmatmul.mubr.f32.gmra.mrb[0].mxu0 %v259
  %v634 = vpop.f32.mrb[0].mxu0
  %v635 = vadd.f32 %v84, %v634
  %v636 = vpop.f32.mrb[0].mxu0
  %637 = vmatprep.mubr.f32.mxu0 0.0
  %638 = vmatmul.mubr.f32.gmra.mrb[0].mxu0 %v262
  %v639 = vpop.f32.mrb[0].mxu0
  %v640 = vadd.f32 %v84, %v639
  %v641 = vpop.f32.mrb[0].mxu0
  %642 = vmatprep.mubr.f32.mxu0 0.0
  %643 = vmatmul.mubr.f32.gmra.mrb[0].mxu0 %v265
  %v644 = vpop.f32.mrb[0].mxu0
  %v645 = vadd.f32 %v84, %v644
  %v646 = vpop.f32.mrb[0].mxu0
  %647 = vmatprep.mubr.f32.mxu0 0.0
  %648 = vmatmul.mubr.f32.gmra.mrb[0].mxu0 %v268
  %v649 = vpop.f32.mrb[0].mxu0
  %v650 = vadd.f32 %v84, %v649
  %v651 = vpop.f32.mrb[0].mxu0
  %652 = vmatprep.mubr.f32.mxu0 0.0
  %653 = vmatmul.mubr.f32.gmra.mrb[0].mxu0 %v271
  %v654 = vpop.f32.mrb[0].mxu0
  %v655 = vadd.f32 %v84, %v654
  %v656 = vpop.f32.mrb[0].mxu0
  %657 = vmatprep.mubr.f32.mxu0 0.0
  %658 = vmatmul.mubr.f32.gmra.mrb[0].mxu0 %v274
  %v659 = vpop.f32.mrb[0].mxu0
  %v660 = vadd.f32 %v84, %v659
  %v661 = vpop.f32.mrb[0].mxu0
  %662 = vmatprep.mubr.f32.mxu0 0.0
  %663 = vmatmul.mubr.f32.gmra.mrb[0].mxu0 %v277
  %v664 = vpop.f32.mrb[0].mxu0
  %v665 = vadd.f32 %v84, %v664
  %v666 = vpop.f32.mrb[0].mxu0
  %667 = vdwg.mxu0
  %vm668 = vcmask 15360
  %669 = vst.msk [vmem:[%s3] sm:$0xff] %vm668, %v350
  %670 = vst.msk [vmem:[%s3 + $0x8] sm:$0xff] %vm668, %v355
  %671 = vst.msk [vmem:[%s3 + $0x10] sm:$0xff] %vm668, %v360
  %672 = vst.msk [vmem:[%s3 + $0x18] sm:$0xff] %vm668, %v365
  %673 = vst.msk [vmem:[%s3 + $0x20] sm:$0xff] %vm668, %v370
  %674 = vst.msk [vmem:[%s3 + $0x28] sm:$0xff] %vm668, %v375
  %675 = vst.msk [vmem:[%s3 + $0x30] sm:$0xff] %vm668, %v380
  %676 = vst.msk [vmem:[%s3 + $0x38] sm:$0xff] %vm668, %v385
  %677 = vst.msk [vmem:[%s3 + $0x40] sm:$0xff] %vm668, %v390
  %678 = vst.msk [vmem:[%s3 + $0x48] sm:$0xff] %vm668, %v395
  %679 = vst.msk [vmem:[%s3 + $0x50] sm:$0xff] %vm668, %v400
  %680 = vst.msk [vmem:[%s3 + $0x58] sm:$0xff] %vm668, %v405
  %681 = vst.msk [vmem:[%s3 + $0x60] sm:$0xff] %vm668, %v410
  %682 = vst.msk [vmem:[%s3 + $0x68] sm:$0xff] %vm668, %v415
  %683 = vst.msk [vmem:[%s3 + $0x70] sm:$0xff] %vm668, %v420
  %684 = vst.msk [vmem:[%s3 + $0x78] sm:$0xff] %vm668, %v425
  %685 = vst.msk [vmem:[%s3 + $0x80] sm:$0xff] %vm668, %v430
  %686 = vst.msk [vmem:[%s3 + $0x88] sm:$0xff] %vm668, %v435
  %687 = vst.msk [vmem:[%s3 + $0x90] sm:$0xff] %vm668, %v440
  %688 = vst.msk [vmem:[%s3 + $0x98] sm:$0xff] %vm668, %v445
  %689 = vst.msk [vmem:[%s3 + $0xa0] sm:$0xff] %vm668, %v450
  %690 = vst.msk [vmem:[%s3 + $0xa8] sm:$0xff] %vm668, %v455
  %691 = vst.msk [vmem:[%s3 + $0xb0] sm:$0xff] %vm668, %v460
  %692 = vst.msk [vmem:[%s3 + $0xb8] sm:$0xff] %vm668, %v465
  %693 = vst.msk [vmem:[%s3 + $0xc0] sm:$0xff] %vm668, %v470
  %694 = vst.msk [vmem:[%s3 + $0xc8] sm:$0xff] %vm668, %v475
  %695 = vst.msk [vmem:[%s3 + $0xd0] sm:$0xff] %vm668, %v480
  %696 = vst.msk [vmem:[%s3 + $0xd8] sm:$0xff] %vm668, %v485
  %697 = vst.msk [vmem:[%s3 + $0xe0] sm:$0xff] %vm668, %v490
  %698 = vst.msk [vmem:[%s3 + $0xe8] sm:$0xff] %vm668, %v495
  %699 = vst.msk [vmem:[%s3 + $0xf0] sm:$0xff] %vm668, %v500
  %700 = vst.msk [vmem:[%s3 + $0xf8] sm:$0xff] %vm668, %v505
  %701 = vst.msk [vmem:[%s3 + $0x100] sm:$0xff] %vm668, %v510
  %702 = vst.msk [vmem:[%s3 + $0x108] sm:$0xff] %vm668, %v515
  %703 = vst.msk [vmem:[%s3 + $0x110] sm:$0xff] %vm668, %v520
  %704 = vst.msk [vmem:[%s3 + $0x118] sm:$0xff] %vm668, %v525
  %705 = vst.msk [vmem:[%s3 + $0x120] sm:$0xff] %vm668, %v530
  %706 = vst.msk [vmem:[%s3 + $0x128] sm:$0xff] %vm668, %v535
  %707 = vst.msk [vmem:[%s3 + $0x130] sm:$0xff] %vm668, %v540
  %708 = vst.msk [vmem:[%s3 + $0x138] sm:$0xff] %vm668, %v545
  %709 = vst.msk [vmem:[%s3 + $0x140] sm:$0xff] %vm668, %v550
  %710 = vst.msk [vmem:[%s3 + $0x148] sm:$0xff] %vm668, %v555
  %711 = vst.msk [vmem:[%s3 + $0x150] sm:$0xff] %vm668, %v560
  %712 = vst.msk [vmem:[%s3 + $0x158] sm:$0xff] %vm668, %v565
  %713 = vst.msk [vmem:[%s3 + $0x160] sm:$0xff] %vm668, %v570
  %714 = vst.msk [vmem:[%s3 + $0x168] sm:$0xff] %vm668, %v575
  %715 = vst.msk [vmem:[%s3 + $0x170] sm:$0xff] %vm668, %v580
  %716 = vst.msk [vmem:[%s3 + $0x178] sm:$0xff] %vm668, %v585
  %717 = vst.msk [vmem:[%s3 + $0x180] sm:$0xff] %vm668, %v590
  %718 = vst.msk [vmem:[%s3 + $0x188] sm:$0xff] %vm668, %v595
  %719 = vst.msk [vmem:[%s3 + $0x190] sm:$0xff] %vm668, %v600
  %720 = vst.msk [vmem:[%s3 + $0x198] sm:$0xff] %vm668, %v605
  %721 = vst.msk [vmem:[%s3 + $0x1a0] sm:$0xff] %vm668, %v610
  %722 = vst.msk [vmem:[%s3 + $0x1a8] sm:$0xff] %vm668, %v615
  %723 = vst.msk [vmem:[%s3 + $0x1b0] sm:$0xff] %vm668, %v620
  %724 = vst.msk [vmem:[%s3 + $0x1b8] sm:$0xff] %vm668, %v625
  %725 = vst.msk [vmem:[%s3 + $0x1c0] sm:$0xff] %vm668, %v630
  %726 = vst.msk [vmem:[%s3 + $0x1c8] sm:$0xff] %vm668, %v635
  %727 = vst.msk [vmem:[%s3 + $0x1d0] sm:$0xff] %vm668, %v640
  %728 = vst.msk [vmem:[%s3 + $0x1d8] sm:$0xff] %vm668, %v645
  %729 = vst.msk [vmem:[%s3 + $0x1e0] sm:$0xff] %vm668, %v650
  %730 = vst.msk [vmem:[%s3 + $0x1e8] sm:$0xff] %vm668, %v655
  %731 = vst.msk [vmem:[%s3 + $0x1f0] sm:$0xff] %vm668, %v660
  %732 = vst.msk [vmem:[%s3 + $0x1f8] sm:$0xff] %vm668, %v665
  // Predicated region
  $region14: #{mymodel_forward.1} parent=0 // pred_check
    _
  $region15: #{mymodel_forward.1} parent=0 // pred_check_branch
    %734 = sbr.rel (0) target = $region17
  $region16: #{mymodel_forward.1} parent=0 // pred_region
    _
  $region17: #{mymodel_forward.1} parent=0 // pred_fallthru
    _
  // Predicated region
  $region18: #{mymodel_forward.1} parent=0 // pred_check
    _
  $region19: #{mymodel_forward.1} parent=0 // pred_check_branch
    %736 = sbr.rel (0) target = $region21
  $region20: #{mymodel_forward.1} parent=0 // pred_region
    _
  $region21: #{mymodel_forward.1} parent=0 // pred_fallthru
    _

</llo_original>
